<compile_context>
chip_gen: v6e
topology: v6e:2x2x1
jax: 0.10.0
libtpu: 0.0.40
codegen_flags: <defaults>
</compile_context>

<pallas_src>
import functools

import jax
import jax.numpy as jnp
from jax import lax
from jax.experimental import pallas as pl
from jax.experimental.pallas import tpu as pltpu

SMOOTHING = 0.3
CONFIDENCE = 1.0 - SMOOTHING


def _make_kernel(n_true: int, tn: int, c: int):
    inv_c = 1.0 / float(c)
    inv_n = 1.0 / float(n_true)

    def kernel(x_ref, t_ref, o_ref, acc_ref):
        i = pl.program_id(0)

        @pl.when(i == 0)
        def _():
            acc_ref[...] = jnp.zeros_like(acc_ref)

        x = x_ref[...].astype(jnp.float32)                 # (tn, c)
        t = t_ref[...]                                     # (tn, 1) int32

        # Fused label-smoothing loss (no logprobs materialized).
        m = jnp.max(x, axis=-1, keepdims=True)             # (tn, 1)
        z = jnp.sum(jnp.exp(x - m), axis=-1, keepdims=True)
        lse = m + jnp.log(z)                               # (tn, 1)

        s = jnp.sum(x, axis=-1, keepdims=True)             # (tn, 1)  sum of logits
        col = lax.broadcasted_iota(jnp.int32, x.shape, 1)  # (tn, c)
        xt = jnp.sum(jnp.where(col == t, x, 0.0),
                     axis=-1, keepdims=True)               # (tn, 1)  x[target]

        loss = lse - CONFIDENCE * xt - SMOOTHING * (s * inv_c)   # (tn, 1)

        # Mask rows that only exist because of padding to a multiple of tn.
        row = i * tn + lax.broadcasted_iota(jnp.int32, (tn, 1), 0)
        loss = jnp.where(row < n_true, loss, 0.0)

        acc_ref[...] += jnp.sum(loss).reshape(1, 1)

        @pl.when(i == pl.num_programs(0) - 1)
        def _():
            o_ref[...] = acc_ref[...] * inv_n

    return kernel


def _choose_tn(n: int, c: int, itemsize: int) -> int:
    # Keep one x tile under ~6 MiB (double-buffered -> ~12 MiB, safe on the
    # v5e 16 MiB scoped-VMEM default; comfortably within v6e/v7x limits).
    budget_bytes = 6 * 1024 * 1024
    tn = budget_bytes // max(1, c * itemsize)
    tn = max(8, min(1024, tn))
    tn = (tn // 8) * 8
    n_pad8 = ((n + 7) // 8) * 8
    return min(tn, n_pad8)


def label_smoothing_loss(x, target, *, tn=None):
    """x: (N, C) float logits; target: (N,) int class indices in [0, C).

    Returns scalar f32 loss.  Precondition: targets must be valid class
    indices (out-of-range targets silently contribute 0 to the NLL term).
    """
    n, c = x.shape
    itemsize = jnp.dtype(x.dtype).itemsize
    if tn is None:
        tn = _choose_tn(n, c, itemsize)
    tn = max(8, (tn // 8) * 8)

    num_tiles = pl.cdiv(n, tn)
    n_pad = num_tiles * tn

    # Zero-pad rows to a multiple of the tile size; padded rows are masked
    # inside the kernel and the final mean divides by the true N.
    if n_pad != n:
        x = jnp.pad(x, ((0, n_pad - n), (0, 0)))
        target = jnp.pad(target, ((0, n_pad - n),))
    t2d = target.astype(jnp.int32).reshape(n_pad, 1)

    kernel = _make_kernel(n, tn, c)

    out = pl.pallas_call(
        kernel,
        out_shape=jax.ShapeDtypeStruct((1, 1), jnp.float32),
        grid_spec=pltpu.PrefetchScalarGridSpec(
            num_scalar_prefetch=0,
            grid=(num_tiles,),
            in_specs=[
                pl.BlockSpec((tn, c), lambda i: (i, 0)),
                pl.BlockSpec((tn, 1), lambda i: (i, 0)),
            ],
            out_specs=pl.BlockSpec((1, 1), lambda i: (0, 0)),
            scratch_shapes=[pltpu.VMEM((1, 1), jnp.float32)],
        ),
        compiler_params=pltpu.CompilerParams(
            dimension_semantics=("arbitrary",),
        ),
    )(x, t2d)
    return out[0, 0]


def _reference(x, target):
    logprobs = jax.nn.log_softmax(x.astype(jnp.float32), axis=-1)
    nll = -jnp.take_along_axis(logprobs, target[:, None], axis=-1)[:, 0]
    smooth = -jnp.mean(logprobs, axis=-1)
    return jnp.mean(CONFIDENCE * nll + SMOOTHING * smooth)


if __name__ == "__main__":
    key = jax.random.PRNGKey(0)
    kx, kt = jax.random.split(key)

    # Small shapes; N deliberately not a multiple of the tile to exercise the
    # padding/masking path, and tn=16 forces multiple grid steps.
    N, C = 50, 32
    x = jax.random.normal(kx, (N, C), dtype=jnp.float32)
    target = jax.random.randint(kt, (N,), 0, C, dtype=jnp.int32)

    loss = label_smoothing_loss(x, target, tn=16)
    jax.block_until_ready(loss)

    ref = _reference(x, target)
    assert jnp.allclose(loss, ref, atol=1e-5, rtol=1e-5), (loss, ref)
    print("KERNEL_OK")
</pallas_src>

<mosaic_0001>
module attributes {stable_mosaic.version = 11 : i64} {
  func.func @kernel(%arg0: i32, %arg1: memref<16x32xf32, #tpu.memory_space<vmem>>, %arg2: memref<16x1xi32, #tpu.memory_space<vmem>>, %arg3: memref<1x1xf32, #tpu.memory_space<vmem>>, %arg4: memref<1x1xf32, #tpu.memory_space<vmem>>) attributes {dimension_semantics = [#tpu.dimension_semantics<arbitrary>], iteration_bounds = array<i64: 4>, scalar_prefetch = 0 : i64, scratch_operands = 1 : i64, tpu.core_type = #tpu.core_type<tc>, window_params = [{transform_indices = @transform_0, window_bounds = array<i64: 16, 32>}, {transform_indices = @transform_1, window_bounds = array<i64: 16, 1>}, {pipeline_mode = #tpu.pipeline_mode<synchronous>, transform_indices = @transform_2, window_bounds = array<i64: 1, 1>}]} {
    %c0_i32 = arith.constant 0 : i32
    %0 = arith.cmpi eq, %arg0, %c0_i32 : i32
    %1 = arith.extui %0 : i1 to i32
    %c0_i32_0 = arith.constant 0 : i32
    %2 = arith.cmpi ne, %1, %c0_i32_0 : i32
    scf.if %2 {
      %cst_18 = arith.constant 0.000000e+00 : f32
      %50 = vector.broadcast %cst_18 : f32 to vector<1x1xf32>
      %c0_19 = arith.constant 0 : index
      %c0_20 = arith.constant 0 : index
      %51 = vector.load %arg4[%c0_19, %c0_20] : memref<1x1xf32, #tpu.memory_space<vmem>>, vector<1x1xf32>
      tpu.vector_store %arg4[%c0_19, %c0_20], %50 {strides = array<i32>} : memref<1x1xf32, #tpu.memory_space<vmem>>, vector<1x1xf32>,
    } else {
    }
    %c0 = arith.constant 0 : index
    %c0_1 = arith.constant 0 : index
    %3 = vector.load %arg1[%c0, %c0_1] : memref<16x32xf32, #tpu.memory_space<vmem>>, vector<16x32xf32>
    %c0_2 = arith.constant 0 : index
    %c0_3 = arith.constant 0 : index
    %4 = vector.load %arg2[%c0_2, %c0_3] : memref<16x1xi32, #tpu.memory_space<vmem>>, vector<16x1xi32>
    %cst = arith.constant dense<0xFF800000> : vector<16xf32>
    %5 = vector.multi_reduction <maximumf>, %3, %cst [1] : vector<16x32xf32> to vector<16xf32>
    %6 = vector.shape_cast %5 : vector<16xf32> to vector<16x1xf32>
    %7 = vector.broadcast %6 : vector<16x1xf32> to vector<16x32xf32>
    %8 = arith.subf %3, %7 : vector<16x32xf32>
    %9 = math.exp %8 : vector<16x32xf32>
    %cst_4 = arith.constant dense<0.000000e+00> : vector<16xf32>
    %10 = vector.multi_reduction <add>, %9, %cst_4 [1] : vector<16x32xf32> to vector<16xf32>
    %11 = vector.shape_cast %10 : vector<16xf32> to vector<16x1xf32>
    %12 = math.log %11 : vector<16x1xf32>
    %13 = arith.addf %6, %12 : vector<16x1xf32>
    %cst_5 = arith.constant dense<0.000000e+00> : vector<16xf32>
    %14 = vector.multi_reduction <add>, %3, %cst_5 [1] : vector<16x32xf32> to vector<16xf32>
    %15 = vector.shape_cast %14 : vector<16xf32> to vector<16x1xf32>
    %16 = tpu.iota {dimensions = array<i32: 1>} : vector<16x32xi32>
    %17 = vector.broadcast %4 : vector<16x1xi32> to vector<16x32xi32>
    %18 = arith.cmpi eq, %16, %17 : vector<16x32xi32>
    %cst_6 = arith.constant 0.000000e+00 : f32
    %19 = vector.broadcast %cst_6 : f32 to vector<16x32xf32>
    %20 = arith.select %18, %3, %19 : vector<16x32xi1>, vector<16x32xf32>
    %cst_7 = arith.constant dense<0.000000e+00> : vector<16xf32>
    %21 = vector.multi_reduction <add>, %20, %cst_7 [1] : vector<16x32xf32> to vector<16xf32>
    %22 = vector.shape_cast %21 : vector<16xf32> to vector<16x1xf32>
    %cst_8 = arith.constant 0.699999988 : f32
    %23 = vector.broadcast %cst_8 : f32 to vector<16x1xf32>
    %24 = arith.mulf %23, %22 : vector<16x1xf32>
    %25 = arith.subf %13, %24 : vector<16x1xf32>
    %cst_9 = arith.constant 3.125000e-02 : f32
    %26 = vector.broadcast %cst_9 : f32 to vector<16x1xf32>
    %27 = arith.mulf %15, %26 : vector<16x1xf32>
    %cst_10 = arith.constant 3.000000e-01 : f32
    %28 = vector.broadcast %cst_10 : f32 to vector<16x1xf32>
    %29 = arith.mulf %28, %27 : vector<16x1xf32>
    %30 = arith.subf %25, %29 : vector<16x1xf32>
    %c16_i32 = arith.constant 16 : i32
    %31 = arith.muli %arg0, %c16_i32 : i32
    %32 = tpu.iota {dimensions = array<i32: 0>} : vector<16x1xi32>
    %33 = vector.broadcast %31 : i32 to vector<16x1xi32>
    %34 = arith.addi %33, %32 : vector<16x1xi32>
    %c50_i32 = arith.constant 50 : i32
    %35 = vector.broadcast %c50_i32 : i32 to vector<16x1xi32>
    %36 = arith.cmpi slt, %34, %35 : vector<16x1xi32>
    %cst_11 = arith.constant 0.000000e+00 : f32
    %37 = vector.broadcast %cst_11 : f32 to vector<16x1xf32>
    %38 = arith.select %36, %30, %37 : vector<16x1xi1>, vector<16x1xf32>
    %c0_12 = arith.constant 0 : index
    %c0_13 = arith.constant 0 : index
    %39 = vector.load %arg4[%c0_12, %c0_13] : memref<1x1xf32, #tpu.memory_space<vmem>>, vector<1x1xf32>
    %40 = vector.shape_cast %38 : vector<16x1xf32> to vector<1x16x1xf32>
    %cst_14 = arith.constant dense<0.000000e+00> : vector<1xf32>
    %41 = vector.multi_reduction <add>, %40, %cst_14 [1, 2] : vector<1x16x1xf32> to vector<1xf32>
    %42 = vector.shape_cast %41 : vector<1xf32> to vector<1x1x1xf32>
    %43 = vector.extract %42[0, 0, 0] : f32 from vector<1x1x1xf32>
    %44 = vector.broadcast %43 : f32 to vector<1x1xf32>
    %45 = arith.addf %39, %44 : vector<1x1xf32>
    %c0_15 = arith.constant 0 : index
    %c0_16 = arith.constant 0 : index
    %46 = vector.load %arg4[%c0_15, %c0_16] : memref<1x1xf32, #tpu.memory_space<vmem>>, vector<1x1xf32>
    tpu.vector_store %arg4[%c0_15, %c0_16], %45 {strides = array<i32>} : memref<1x1xf32, #tpu.memory_space<vmem>>, vector<1x1xf32>,
    %c3_i32 = arith.constant 3 : i32
    %47 = arith.cmpi eq, %arg0, %c3_i32 : i32
    %48 = arith.extui %47 : i1 to i32
    %c0_i32_17 = arith.constant 0 : i32
    %49 = arith.cmpi ne, %48, %c0_i32_17 : i32
    scf.if %49 {
      %c0_18 = arith.constant 0 : index
      %c0_19 = arith.constant 0 : index
      %50 = vector.load %arg4[%c0_18, %c0_19] : memref<1x1xf32, #tpu.memory_space<vmem>>, vector<1x1xf32>
      %cst_20 = arith.constant 2.000000e-02 : f32
      %51 = vector.broadcast %cst_20 : f32 to vector<1x1xf32>
      %52 = arith.mulf %50, %51 : vector<1x1xf32>
      %c0_21 = arith.constant 0 : index
      %c0_22 = arith.constant 0 : index
      %53 = vector.load %arg3[%c0_21, %c0_22] : memref<1x1xf32, #tpu.memory_space<vmem>>, vector<1x1xf32>
      tpu.vector_store %arg3[%c0_21, %c0_22], %52 {strides = array<i32>} : memref<1x1xf32, #tpu.memory_space<vmem>>, vector<1x1xf32>,
    } else {
    }
    return
  }
  func.func @transform_0(%arg0: i32) -> (i32, i32) {
    %c0_i32 = arith.constant 0 : i32
    %c0_i32_0 = arith.constant 0 : i32
    return %arg0, %c0_i32 : i32, i32
  }
  func.func @transform_1(%arg0: i32) -> (i32, i32) {
    %c0_i32 = arith.constant 0 : i32
    %c0_i32_0 = arith.constant 0 : i32
    return %arg0, %c0_i32 : i32, i32
  }
  func.func @transform_2(%arg0: i32) -> (i32, i32) {
    %c0_i32 = arith.constant 0 : i32
    %c0_i32_0 = arith.constant 0 : i32
    %c0_i32_1 = arith.constant 0 : i32
    return %c0_i32, %c0_i32_0 : i32, i32
  }
}

</mosaic_0001>

<llo_original>
// kernel: tpu_custom_call.1
$region0: #{tpu_custom_call.1}
  #allocation0 [shape = 'u32[]', space=smem, size = 0x4, offset = 0x4, fixed_abs, tag = 'smem constant byte address 0x4 - core index']
  #allocation1 [shape = 'u32[144,128]{1,0:T(1,128)}', space=vmem, size = 0x12000, scoped, tag = 'internal scratch']
  #allocation2 [shape = 'f32[1,1]{1,0:T(1,128)}', space=vmem, size = 0x200, scoped, tag = 'scratch operand']
  %s0 = inlined_call_operand.vmem [shape: f32[64,32], index: 0, kind: input, shape index: {}]
  %s1 = inlined_call_operand.vmem [shape: s32[64,1], index: 1, kind: input, shape index: {}]
  %s2 = inlined_call_operand.hbm [shape: f32[1,1], index: 2, kind: output, shape index: {}]
  %s3 = sld [smem:[#allocation0]]
  $region49: #{tpu_custom_call.1} parent=0
    _
  %s5 = ssub.s32 1, %s3
  %s6 = scalar_select 0, %s5, %s3
  $region1: #{tpu_custom_call.1} parent=0
    #allocation3 [shape = 'u8[512]{0}', space=vmem, size = 0x400, scoped, tag = 'output window, operand 0, single buffered']
    #allocation4 [shape = 's32[2]{0}', space=sflag, size = 0x8, scoped, tag = 'scoped memory for tpu_custom_call.1']
    %7 = vsyncpa [#allocation4], 0
    loop: start=0, step=1, limit=6
    $region2: #{tpu_custom_call.1} parent=1 // loop_pre_header
      _
    $region3: #{tpu_custom_call.1} parent=1 // loop_header
      %s9 = sphi 0, %s13
      %p10 = scmp.ge.s32.totalorder %s9, 6
      %s19 = sphi 0, %s21
      %s22 = sphi 0, %s19
      %s23 = sphi 0, %s22
      %s39 = sphi 0, %s23
      %s45 = sphi 0, %s47
      %s48 = sphi 0, %s45
      %s49 = sphi 0, %s48
      %s65 = sphi 0, %s49
      %s69 = sphi 0, %s69
      %s71 = sphi 0, %s69
      %s72 = sphi 0, %s71
      %s86 = sphi 0, %s72
    $region4: #{tpu_custom_call.1} parent=1 // loop_header_branch
      %12 = sbr.rel (%p10) target = $region8
    $region5: #{tpu_custom_call.1} parent=1 // loop_body
      %s14 = ssub.s32 %s9, 1
      %s15 = ssub.s32 %s9, 2
      %s16 = sadd.s32 %s9, 1
      %s17 = ssub.s32 %s9, %s16
      %p18 = scmp.eq.s32.totalorder %s17, 0
      %s20 = sadd.s32 %s19, 1
      %s21 = scalar_select %p18, %s19, %s20
      %p24 = pneg %p18
      %p25 = scmp.eq.s32.totalorder %s9, 3
      %p26 = por %p24, %p25
      %p27 = scmp.ne.s32.totalorder %s19, %s22
      %p28 = scmp.eq.s32.totalorder %s9, 0
      %p29 = por %p27, %p28
      %p30 = scmp.ne.s32.totalorder %s19, %s22
      %p31 = scmp.eq.s32.totalorder %s14, 3
      %p32 = por %p30, %p31
      %p33 = scmp.ne.s32.totalorder %s22, %s23
      %p34 = scmp.eq.s32.totalorder %s14, 0
      %p35 = por %p33, %p34
      %p36 = scmp.ne.s32.totalorder %s22, %s23
      %p37 = scmp.eq.s32.totalorder %s15, 3
      %p38 = por %p36, %p37
      %p40 = scmp.ne.s32.totalorder %s23, %s39
      %p41 = scmp.eq.s32.totalorder %s15, 0
      %p42 = por %p40, %p41
      %s43 = ssub.s32 %s9, %s16
      %p44 = scmp.eq.s32.totalorder %s43, 0
      %s46 = sadd.s32 %s45, 1
      %s47 = scalar_select %p44, %s45, %s46
      %p50 = pneg %p44
      %p51 = scmp.eq.s32.totalorder %s9, 3
      %p52 = por %p50, %p51
      %p53 = scmp.ne.s32.totalorder %s45, %s48
      %p54 = scmp.eq.s32.totalorder %s9, 0
      %p55 = por %p53, %p54
      %p56 = scmp.ne.s32.totalorder %s45, %s48
      %p57 = scmp.eq.s32.totalorder %s14, 3
      %p58 = por %p56, %p57
      %p59 = scmp.ne.s32.totalorder %s48, %s49
      %p60 = scmp.eq.s32.totalorder %s14, 0
      %p61 = por %p59, %p60
      %p62 = scmp.ne.s32.totalorder %s48, %s49
      %p63 = scmp.eq.s32.totalorder %s15, 3
      %p64 = por %p62, %p63
      %p66 = scmp.ne.s32.totalorder %s49, %s65
      %p67 = scmp.eq.s32.totalorder %s15, 0
      %p68 = por %p66, %p67
      %s70 = sadd.s32 %s69, 1
      %p73 = scmp.eq.s32.totalorder %s9, 3
      %p74 = scmp.ne.s32.totalorder %s69, %s71
      %p75 = scmp.eq.s32.totalorder %s9, 0
      %p76 = por %p74, %p75
      %p77 = scmp.ne.s32.totalorder %s69, %s71
      %p78 = scmp.eq.s32.totalorder %s14, 3
      %p79 = por %p77, %p78
      %p80 = scmp.ne.s32.totalorder %s71, %s72
      %p81 = scmp.eq.s32.totalorder %s14, 0
      %p82 = por %p80, %p81
      %p83 = scmp.ne.s32.totalorder %s71, %s72
      %p84 = scmp.eq.s32.totalorder %s15, 3
      %p85 = por %p83, %p84
      %p87 = scmp.ne.s32.totalorder %s72, %s86
      %p88 = scmp.eq.s32.totalorder %s15, 0
      %p89 = por %p87, %p88
      %p90 = scmp.le.s32.totalorder 1, %s9
      %p91 = scmp.lt.s32.totalorder %s9, 5
      %p92 = pnand %p90, %p91
      %p93 = pneg %p92
      // Predicated region
      $region9: #{tpu_custom_call.1} parent=5 // pred_check
        _
      $region10: #{tpu_custom_call.1} parent=5 // pred_check_branch
        %95 = sbr.rel (%p92) target = $region12
      $region11: #{tpu_custom_call.1} parent=5 // pred_region
        %s96 = ssub.s32 %s9, 1
      $region12: #{tpu_custom_call.1} parent=5 // pred_fallthru
        _
      %p97 = scmp.lt.s32.totalorder %s9, 4
      // Predicated region
      $region13: #{tpu_custom_call.1} parent=5 // pred_check
        %p98 = pneg %p97
      $region14: #{tpu_custom_call.1} parent=5 // pred_check_branch
        %100 = sbr.rel (%p98) target = $region16
      $region15: #{tpu_custom_call.1} parent=5 // pred_region
        // Predicated region
        $region17: #{tpu_custom_call.1} parent=15 // pred_check
          %p101 = pneg %p29
        $region18: #{tpu_custom_call.1} parent=15 // pred_check_branch
          %103 = sbr.rel (%p101) target = $region20
        $region19: #{tpu_custom_call.1} parent=15 // pred_region
          %s104 = smul.u32 2, %s9
          %p105 = scmp.lt.s32.totalorder %s104, 7
          %s106 = scalar_select %p105, %s104, 7
          %s107 = smul.addr %s106, 8
          %s108 = scalar_lea.vmem %s0, %s107
          %s109 = smul.u32 2, %s9
        $region20: #{tpu_custom_call.1} parent=15 // pred_fallthru
          _
        // Predicated region
        $region21: #{tpu_custom_call.1} parent=15 // pred_check
          %p110 = pneg %p55
        $region22: #{tpu_custom_call.1} parent=15 // pred_check_branch
          %112 = sbr.rel (%p110) target = $region24
        $region23: #{tpu_custom_call.1} parent=15 // pred_region
          %s113 = smul.u32 2, %s9
          %p114 = scmp.lt.s32.totalorder %s113, 7
          %s115 = scalar_select %p114, %s113, 7
          %s116 = smul.addr %s115, 8
          %s117 = scalar_lea.vmem %s1, %s116
          %s118 = smul.u32 2, %s9
        $region24: #{tpu_custom_call.1} parent=15 // pred_fallthru
          _
      $region16: #{tpu_custom_call.1} parent=5 // pred_fallthru
        _
      %p119 = scmp.le.s32.totalorder 1, %s9
      %p120 = scmp.lt.s32.totalorder %s9, 5
      %p121 = pnand %p119, %p120
      %p122 = pneg %p121
      // Predicated region
      $region25: #{tpu_custom_call.1} parent=5 // pred_check
        _
      $region26: #{tpu_custom_call.1} parent=5 // pred_check_branch
        %124 = sbr.rel (%p121) target = $region28
      $region27: #{tpu_custom_call.1} parent=5 // pred_region
        %s125 = ssub.s32 %s9, 1
        %s126 = smul.u32 2, %s14
        %p127 = scmp.lt.s32.totalorder %s126, 7
        %s128 = scalar_select %p127, %s126, 7
        %s129 = smul.addr %s128, 8
        %s130 = scalar_lea.vmem %s0, %s129
        %p131 = pneg %p35
        %p132 = pneg %p32
        %s133 = smul.u32 2, %s14
        %p134 = scmp.lt.s32.totalorder %s133, 7
        %s135 = scalar_select %p134, %s133, 7
        %s136 = smul.addr %s135, 8
        %s137 = scalar_lea.vmem %s1, %s136
        %p138 = pneg %p61
        %p139 = pneg %p58
        %p140 = pneg %p82
        %p141 = pneg %p79
        %s142 = smul.u32 2, %s14
        %p143 = scmp.lt.s32.totalorder %s142, 7
        %s144 = scalar_select %p143, %s142, 7
        %s145 = smul.addr %s144, 8
        %s146 = scalar_lea.vmem %s0, %s145
        %s147 = smul.u32 2, %s14
        %s148 = smul.u32 2, %s14
        %p149 = scmp.lt.s32.totalorder %s148, 7
        %s150 = scalar_select %p149, %s148, 7
        %s151 = smul.addr %s150, 8
        %s152 = scalar_lea.vmem %s1, %s151
        %s153 = smul.u32 2, %s14
        %p154 = scmp.eq.s32.totalorder %s14, 0
        // Predicated region
        $region29: #{tpu_custom_call.1} parent=27 // pred_check
          %p155 = pneg %p154
        $region30: #{tpu_custom_call.1} parent=27 // pred_check_branch
          %157 = sbr.rel (%p155) target = $region32
        $region31: #{tpu_custom_call.1} parent=27 // pred_region
          %vm158 = vcmask 0
          %159 = vst.msk [vmem:[#allocation2] sm:$0x1] %vm158, 0.0
        $region32: #{tpu_custom_call.1} parent=27 // pred_fallthru
          _
        %v160 = vld [vmem:[%s146] sm:$0xff]
        %v161 = vld [vmem:[%s146 + $0x8] sm:$0xff]
        %v162 = vld [vmem:[%s152] sm:$0xff]
        %v163 = vld [vmem:[%s152 + $0x8] sm:$0xff]
        %vm164 = vcmask 261120
        %v165 = vsel %vm164, %v160, -inf
        %166 = vmax.xlane.f32.xlu0 %v165
        %v167 = vpop.xlane.xlu0 %166
        %v168 = vsel %vm164, %v161, -inf
        %169 = vmax.xlane.f32.xlu0 %v168
        %v170 = vpop.xlane.xlu0 %169
        %v171 = vsub.f32 %v160, %v167
        %v172 = vsub.f32 %v161, %v170
        %v173 = vmul.f32 %v171, 1.442695
        %v174 = vpow.pop %v173
        %v175 = vmul.f32 %v172, 1.442695
        %v176 = vpow.pop %v175
        %v177 = vsel %vm164, %v174, 0.0
        %178 = vadd.xlane.f32.xlu0 %v177
        %v179 = vpop.xlane.xlu0 %178
        %v180 = vsel %vm164, %v176, 0.0
        %181 = vadd.xlane.f32.xlu0 %v180
        %v182 = vpop.xlane.xlu0 %181
        %v183 = vlog2.pop %v179
        %v184 = vmul.f32 %v183, 0.6931472
        %v185 = vlog2.pop %v182
        %v186 = vmul.f32 %v185, 0.6931472
        %v187 = vadd.f32 %v167, %v184
        %v188 = vadd.f32 %v170, %v186
        %v189 = vsel %vm164, %v160, 0.0
        %190 = vadd.xlane.f32.xlu0 %v189
        %v191 = vpop.xlane.xlu0 %190
        %v192 = vsel %vm164, %v161, 0.0
        %193 = vadd.xlane.f32.xlu0 %v192
        %v194 = vpop.xlane.xlu0 %193
        %v195 = vlaneseq
        %v196 = vand.u32 %v195, 127
        %197 = vset.pattern.permute.xlu0 0
        %198 = vperm.xlu0 %197, %v162
        %v199 = vpop.permute.xlu0 %198
        %200 = vset.pattern.permute.xlu0 0
        %201 = vperm.xlu0 %200, %v163
        %v202 = vpop.permute.xlu0 %201
        %vm203 = vcmp.eq.s32.totalorder %v196, %v199
        %vm204 = vcmp.eq.s32.totalorder %v196, %v202
        %v205 = vsel %vm203, %v160, 0.0
        %v206 = vsel %vm204, %v161, 0.0
        %v207 = vsel %vm164, %v205, 0.0
        %208 = vadd.xlane.f32.xlu0 %v207
        %v209 = vpop.xlane.xlu0 %208
        %v210 = vsel %vm164, %v206, 0.0
        %211 = vadd.xlane.f32.xlu0 %v210
        %v212 = vpop.xlane.xlu0 %211
        %v213 = vmul.f32 %v209, 0.7
        %v214 = vmul.f32 %v212, 0.7
        %v215 = vsub.f32 %v187, %v213
        %v216 = vsub.f32 %v188, %v214
        %v217 = vmul.f32 %v191, 0.03125
        %v218 = vmul.f32 %v194, 0.03125
        %v219 = vmul.f32 %v217, 0.3
        %v220 = vmul.f32 %v218, 0.3
        %v221 = vsub.f32 %v215, %v219
        %v222 = vsub.f32 %v216, %v220
        %s223 = smul.u32 %s14, 16
        %v224 = vlaneseq
        %v225 = vshrl.u32 %v224, 7
        %v226 = vadd.s32 %v225, 8
        %v227 = vstv %s223
        %v228 = vadd.s32 %v227, %v225
        %v229 = vadd.s32 %v227, %v226
        %vm230 = vcmp.lt.s32.totalorder %v228, 50
        %vm231 = vcmp.lt.s32.totalorder %v229, 50
        %v232 = vsel %vm230, %v221, 0.0
        %v233 = vsel %vm231, %v222, 0.0
        %v234 = vld [vmem:[#allocation2] sm:$0x1]
        %vm235 = vcmask 7168
        %v236 = vsel %vm235, %v232, 0.0
        %v237 = vsel %vm235, %v233, 0.0
        %v238 = vadd.f32 %v236, %v237
        %239 = vadd.xlane.f32.xlu0 %v238
        %v240 = vpop.xlane.xlu0 %239
        %v241 = vrot.slane %v240, 4
        %v242 = vadd.f32 %v240, %v241
        %v243 = vrot.slane %v242, 2
        %v244 = vadd.f32 %v242, %v243
        %v245 = vrot.slane %v244, 1
        %v246 = vadd.f32 %v244, %v245
        %s247 = vtos %v246
        %v248 = vstv %s247
        %v249 = vadd.f32 %v234, %v248
        %vm250 = vcmask 0
        %251 = vst.msk [vmem:[#allocation2] sm:$0x1] %vm250, %v249
        %p252 = scmp.eq.s32.totalorder %s14, 3
        // Predicated region
        $region33: #{tpu_custom_call.1} parent=27 // pred_check
          %p253 = pneg %p252
        $region34: #{tpu_custom_call.1} parent=27 // pred_check_branch
          %255 = sbr.rel (%p253) target = $region36
        $region35: #{tpu_custom_call.1} parent=27 // pred_region
          %v256 = vld [vmem:[#allocation2] sm:$0x1]
          %v257 = vmul.f32 %v256, 0.02
          %258 = vst.msk [vmem:[#allocation3] sm:$0x1] %vm250, %v257
        $region36: #{tpu_custom_call.1} parent=27 // pred_fallthru
          _
        // Predicated region
        $region37: #{tpu_custom_call.1} parent=27 // pred_check
          %p259 = pneg %p79
        $region38: #{tpu_custom_call.1} parent=27 // pred_check_branch
          %261 = sbr.rel (%p259) target = $region40
        $region39: #{tpu_custom_call.1} parent=27 // pred_region
          %s263 = ssub.s32 16, 16
          %264 = vsyncadd [#allocation4], %s263
          %s266 = sshll.u32 [#allocation3], 4
          %s267 = int_to_ptr.vmem [resolvable:$true] %s266
          %269 = dma.vmem_to_hbm [thread:$0]  %s267, 16, %s2, [#allocation4]
        $region40: #{tpu_custom_call.1} parent=27 // pred_fallthru
          _
        // Predicated region
        $region41: #{tpu_custom_call.1} parent=27 // pred_check
          %p270 = pneg %p79
        $region42: #{tpu_custom_call.1} parent=27 // pred_check_branch
          %272 = sbr.rel (%p270) target = $region44
        $region43: #{tpu_custom_call.1} parent=27 // pred_region
          %273 = dma.done [#allocation4], 16
        $region44: #{tpu_custom_call.1} parent=27 // pred_fallthru
          _
      $region28: #{tpu_custom_call.1} parent=5 // pred_fallthru
        _
      %p274 = scmp.le.s32.totalorder 2, %s9
      // Predicated region
      $region45: #{tpu_custom_call.1} parent=5 // pred_check
        %p275 = pneg %p274
      $region46: #{tpu_custom_call.1} parent=5 // pred_check_branch
        %277 = sbr.rel (%p275) target = $region48
      $region47: #{tpu_custom_call.1} parent=5 // pred_region
        %s278 = ssub.s32 %s9, 2
      $region48: #{tpu_custom_call.1} parent=5 // pred_fallthru
        _
    $region6: #{tpu_custom_call.1} parent=1 // loop_footer
      %s13 = sadd.s32 1, %s9
    $region7: #{tpu_custom_call.1} parent=1 // loop_footer_branch
      %8 = sbr.rel target = $region3
    $region8: #{tpu_custom_call.1} parent=1 // loop_exit
      _
    %279 = vsyncpa [#allocation4], 1
    %s280 = scalar_lea.sflag [#allocation4], 1
    %281 = vsyncpa %s280, 1

</llo_original>
